<compile_context>
chip_gen: v7x
topology: tpu7x:2x2x1
jax: 0.10.0
libtpu: 0.0.40
codegen_flags: <defaults>
</compile_context>

<pallas_src>
import functools

import jax
import jax.numpy as jnp
from jax.experimental import pallas as pl
from jax.experimental.pallas import tpu as pltpu


def _mlp_kernel(x_ref, w1_ref, b1_ref, w2_ref, b2_ref, o_ref):
    # fc1: bf16 x @ bf16 W1 -> f32 accumulator on the MXU.
    h = jnp.dot(x_ref[...], w1_ref[...], preferred_element_type=jnp.float32)
    # bias + ReLU in f32 (accumulator precision).
    h = jnp.maximum(h + b1_ref[...], 0.0)
    # fc2: cast the activation once to bf16, accumulate in f32.
    out = jnp.dot(h.astype(jnp.bfloat16), w2_ref[...],
                  preferred_element_type=jnp.float32)
    o_ref[...] = (out + b2_ref[...]).astype(o_ref.dtype)


def _round_up(x, m):
    return ((x + m - 1) // m) * m


@functools.partial(jax.jit, static_argnames=("batch_tile",))
def mlp_xavier_forward(x, w1_t, b1, w2_t, b2, *, batch_tile=256):
    """x: [B, in_dim]; w1_t: [in_dim, hidden]; b1: [1, hidden];
    w2_t: [hidden, out_dim]; b2: [1, out_dim] -> [B, out_dim]."""
    B, K = x.shape
    H = w1_t.shape[1]
    N = w2_t.shape[1]

    # Pad K and N to lane-native 128 multiples (zero padding, exact math),
    # pad B to a multiple of the batch tile. All padding is glue-only and is
    # stripped before returning.
    K_pad = _round_up(K, 128)
    N_pad = _round_up(N, 128)
    TB = min(batch_tile, _round_up(B, 16))   # bf16 sublane-friendly tile
    B_pad = _round_up(B, TB)

    xb = jnp.zeros((B_pad, K_pad), jnp.bfloat16).at[:B, :K].set(
        x.astype(jnp.bfloat16))
    w1b = jnp.zeros((K_pad, H), jnp.bfloat16).at[:K, :].set(
        w1_t.astype(jnp.bfloat16))
    w2b = jnp.zeros((H, N_pad), jnp.bfloat16).at[:, :N].set(
        w2_t.astype(jnp.bfloat16))
    b1f = b1.astype(jnp.float32)
    b2f = jnp.zeros((1, N_pad), jnp.float32).at[:, :N].set(
        b2.astype(jnp.float32))

    grid = (B_pad // TB,)

    flops = 2 * B_pad * K_pad * H + 2 * B_pad * H * N_pad
    bytes_accessed = (xb.size * 2 + w1b.size * 2 + w2b.size * 2
                      + b1f.size * 4 + b2f.size * 4 + B_pad * N_pad * 4)

    out = pl.pallas_call(
        _mlp_kernel,
        out_shape=jax.ShapeDtypeStruct((B_pad, N_pad), jnp.float32),
        grid=grid,
        in_specs=[
            pl.BlockSpec((TB, K_pad), lambda i: (i, 0)),   # x tile (pipelined)
            pl.BlockSpec((K_pad, H), lambda i: (0, 0)),    # W1 (VMEM-resident)
            pl.BlockSpec((1, H), lambda i: (0, 0)),        # b1
            pl.BlockSpec((H, N_pad), lambda i: (0, 0)),    # W2 (VMEM-resident)
            pl.BlockSpec((1, N_pad), lambda i: (0, 0)),    # b2
        ],
        out_specs=pl.BlockSpec((TB, N_pad), lambda i: (i, 0)),
        compiler_params=pltpu.CompilerParams(
            dimension_semantics=("parallel",)),            # shard tiles on v7x
        cost_estimate=pl.CostEstimate(
            flops=flops, transcendentals=0, bytes_accessed=bytes_accessed),
    )(xb, w1b, b1f, w2b, b2f)

    return out[:B, :N].astype(x.dtype)


def xavier_uniform(key, shape):
    """Matches torch.nn.init.xavier_uniform_ for a Linear weight [out, in]."""
    fan_out, fan_in = shape
    bound = (6.0 / (fan_in + fan_out)) ** 0.5
    return jax.random.uniform(key, shape, dtype=jnp.float32,
                              minval=-bound, maxval=bound)


def init_mlp_xavier_params(key, input_dim, output_dim, hidden_dim=256):
    k1, k2 = jax.random.split(key)
    # PyTorch stores Linear weight as [out_features, in_features]; transpose
    # once here (glue) so the kernel runs row-major matmuls.
    w1 = xavier_uniform(k1, (hidden_dim, input_dim))   # fc1.weight
    w2 = xavier_uniform(k2, (output_dim, hidden_dim))  # fc2.weight
    b1 = jnp.zeros((1, hidden_dim), jnp.float32)       # fc1.bias (zeros)
    b2 = jnp.zeros((1, output_dim), jnp.float32)       # fc2.bias (zeros)
    return w1.T, b1, w2.T, b2


def reference_forward_mixed(x, w1_t, b1, w2_t, b2):
    """Same bf16-input / f32-accumulate math as the kernel."""
    h = jnp.dot(x.astype(jnp.bfloat16), w1_t.astype(jnp.bfloat16),
                preferred_element_type=jnp.float32)
    h = jnp.maximum(h + b1, 0.0)
    out = jnp.dot(h.astype(jnp.bfloat16), w2_t.astype(jnp.bfloat16),
                  preferred_element_type=jnp.float32)
    return out + b2


def reference_forward_f32(x, w1_t, b1, w2_t, b2):
    h = jnp.maximum(x @ w1_t + b1, 0.0)
    return h @ w2_t + b2


if __name__ == "__main__":
    key = jax.random.PRNGKey(0)
    k_x, k_p = jax.random.split(key)

    batch, input_dim, output_dim, hidden_dim = 8, 32, 8, 256

    x = jax.random.normal(k_x, (batch, input_dim), dtype=jnp.float32)
    w1_t, b1, w2_t, b2 = init_mlp_xavier_params(
        k_p, input_dim, output_dim, hidden_dim)

    out = mlp_xavier_forward(x, w1_t, b1, w2_t, b2)
    jax.block_until_ready(out)

    assert out.shape == (batch, output_dim)

    # Exact-path check against an identical bf16/f32 mixed-precision reference.
    ref_mixed = reference_forward_mixed(x, w1_t, b1, w2_t, b2)
    assert jnp.allclose(out, ref_mixed, atol=1e-3, rtol=1e-3), \
        "mismatch vs mixed-precision reference"

    # Looser sanity check against the pure-f32 reference (bf16 activation error).
    ref_f32 = reference_forward_f32(x, w1_t, b1, w2_t, b2)
    assert jnp.allclose(out, ref_f32, atol=5e-2, rtol=5e-2), \
        "mismatch vs f32 reference"

    print("KERNEL_OK")
</pallas_src>

<mosaic_0001>
module attributes {stable_mosaic.version = 11 : i64} {
  func.func @_mlp_kernel(%arg0: i32, %arg1: memref<16x128xbf16, #tpu.memory_space<vmem>>, %arg2: memref<128x256xbf16, #tpu.memory_space<vmem>>, %arg3: memref<1x256xf32, #tpu.memory_space<vmem>>, %arg4: memref<256x128xbf16, #tpu.memory_space<vmem>>, %arg5: memref<1x128xf32, #tpu.memory_space<vmem>>, %arg6: memref<16x128xf32, #tpu.memory_space<vmem>>) attributes {dimension_semantics = [#tpu.dimension_semantics<parallel>], iteration_bounds = array<i64: 1>, scalar_prefetch = 0 : i64, scratch_operands = 0 : i64, tpu.core_type = #tpu.core_type<tc>, window_params = [{transform_indices = @transform_0, window_bounds = array<i64: 16, 128>}, {pipeline_mode = #tpu.pipeline_mode<synchronous>, transform_indices = @transform_1, window_bounds = array<i64: 128, 256>}, {pipeline_mode = #tpu.pipeline_mode<synchronous>, transform_indices = @transform_2, window_bounds = array<i64: 1, 256>}, {pipeline_mode = #tpu.pipeline_mode<synchronous>, transform_indices = @transform_3, window_bounds = array<i64: 256, 128>}, {pipeline_mode = #tpu.pipeline_mode<synchronous>, transform_indices = @transform_4, window_bounds = array<i64: 1, 128>}, {transform_indices = @transform_5, window_bounds = array<i64: 16, 128>}]} {
    %c0 = arith.constant 0 : index
    %c0_0 = arith.constant 0 : index
    %0 = vector.load %arg1[%c0, %c0_0] : memref<16x128xbf16, #tpu.memory_space<vmem>>, vector<16x128xbf16>
    %c0_1 = arith.constant 0 : index
    %c0_2 = arith.constant 0 : index
    %1 = vector.load %arg2[%c0_1, %c0_2] : memref<128x256xbf16, #tpu.memory_space<vmem>>, vector<128x256xbf16>
    %cst = arith.constant dense<0.000000e+00> : vector<16x256xf32>
    %2 = tpu.matmul %0, %1, %cst {dimension_numbers = #tpu.dot_dimension_numbers<[1], [0], [0], [1], [0, 0, 1, 1], [], []>} : vector<16x128xbf16>, vector<128x256xbf16>, vector<16x256xf32> -> vector<16x256xf32>
    %c0_3 = arith.constant 0 : index
    %c0_4 = arith.constant 0 : index
    %3 = vector.load %arg3[%c0_3, %c0_4] : memref<1x256xf32, #tpu.memory_space<vmem>>, vector<1x256xf32>
    %4 = vector.broadcast %3 : vector<1x256xf32> to vector<16x256xf32>
    %5 = arith.addf %2, %4 : vector<16x256xf32>
    %cst_5 = arith.constant 0.000000e+00 : f32
    %6 = vector.broadcast %cst_5 : f32 to vector<16x256xf32>
    %7 = arith.maximumf %5, %6 : vector<16x256xf32>
    %8 = arith.truncf %7 : vector<16x256xf32> to vector<16x256xbf16>
    %c0_6 = arith.constant 0 : index
    %c0_7 = arith.constant 0 : index
    %9 = vector.load %arg4[%c0_6, %c0_7] : memref<256x128xbf16, #tpu.memory_space<vmem>>, vector<256x128xbf16>
    %cst_8 = arith.constant dense<0.000000e+00> : vector<16x128xf32>
    %10 = tpu.matmul %8, %9, %cst_8 {dimension_numbers = #tpu.dot_dimension_numbers<[1], [0], [0], [1], [0, 0, 1, 1], [], []>} : vector<16x256xbf16>, vector<256x128xbf16>, vector<16x128xf32> -> vector<16x128xf32>
    %c0_9 = arith.constant 0 : index
    %c0_10 = arith.constant 0 : index
    %11 = vector.load %arg5[%c0_9, %c0_10] : memref<1x128xf32, #tpu.memory_space<vmem>>, vector<1x128xf32>
    %12 = vector.broadcast %11 : vector<1x128xf32> to vector<16x128xf32>
    %13 = arith.addf %10, %12 : vector<16x128xf32>
    %c0_11 = arith.constant 0 : index
    %c0_12 = arith.constant 0 : index
    %14 = vector.load %arg6[%c0_11, %c0_12] : memref<16x128xf32, #tpu.memory_space<vmem>>, vector<16x128xf32>
    tpu.vector_store %arg6[%c0_11, %c0_12], %13 {strides = array<i32>} : memref<16x128xf32, #tpu.memory_space<vmem>>, vector<16x128xf32>,
    return
  }
  func.func @transform_0(%arg0: i32) -> (i32, i32) {
    %c0_i32 = arith.constant 0 : i32
    %c0_i32_0 = arith.constant 0 : i32
    return %arg0, %c0_i32 : i32, i32
  }
  func.func @transform_1(%arg0: i32) -> (i32, i32) {
    %c0_i32 = arith.constant 0 : i32
    %c0_i32_0 = arith.constant 0 : i32
    %c0_i32_1 = arith.constant 0 : i32
    return %c0_i32, %c0_i32_0 : i32, i32
  }
  func.func @transform_2(%arg0: i32) -> (i32, i32) {
    %c0_i32 = arith.constant 0 : i32
    %c0_i32_0 = arith.constant 0 : i32
    %c0_i32_1 = arith.constant 0 : i32
    return %c0_i32, %c0_i32_0 : i32, i32
  }
  func.func @transform_3(%arg0: i32) -> (i32, i32) {
    %c0_i32 = arith.constant 0 : i32
    %c0_i32_0 = arith.constant 0 : i32
    %c0_i32_1 = arith.constant 0 : i32
    return %c0_i32, %c0_i32_0 : i32, i32
  }
  func.func @transform_4(%arg0: i32) -> (i32, i32) {
    %c0_i32 = arith.constant 0 : i32
    %c0_i32_0 = arith.constant 0 : i32
    %c0_i32_1 = arith.constant 0 : i32
    return %c0_i32, %c0_i32_0 : i32, i32
  }
  func.func @transform_5(%arg0: i32) -> (i32, i32) {
    %c0_i32 = arith.constant 0 : i32
    %c0_i32_0 = arith.constant 0 : i32
    return %arg0, %c0_i32 : i32, i32
  }
}

</mosaic_0001>

<llo_original>
// kernel: mlp_xavier_forward.1
$region0: #{mlp_xavier_forward.1}
  #allocation0 [shape = 'u32[]', space=smem, size = 0x4, offset = 0x4, fixed_abs, tag = 'smem constant byte address 0x4 - core index']
  #allocation1 [shape = 'u32[144,128]{1,0:T(1,128)}', space=vmem, size = 0x12000, scoped, tag = 'internal scratch']
  %s0 = inlined_call_operand.vmem [shape: bf16[16,128], index: 0, kind: input, shape index: {}]
  %s1 = inlined_call_operand.vmem [shape: bf16[128,256], index: 1, kind: input, shape index: {}]
  %s2 = inlined_call_operand.vmem [shape: f32[1,256], index: 2, kind: input, shape index: {}]
  %s3 = inlined_call_operand.vmem [shape: bf16[256,128], index: 3, kind: input, shape index: {}]
  %s4 = inlined_call_operand.vmem [shape: f32[1,128], index: 4, kind: input, shape index: {}]
  %s5 = inlined_call_operand.vmem [shape: f32[16,128], index: 5, kind: output, shape index: {}]
  %s6 = sld [smem:[#allocation0]]
  $region30: #{mlp_xavier_forward.1} parent=0
    _
  %s8 = ssub.s32 1, %s6
  %s9 = scalar_select 0, %s8, %s6
  // Predicated region
  $region2: #{mlp_xavier_forward.1} parent=0 // pred_check
    _
  $region3: #{mlp_xavier_forward.1} parent=0 // pred_check_branch
    %11 = sbr.rel (0) target = $region5
  $region4: #{mlp_xavier_forward.1} parent=0 // pred_region
    _
  $region5: #{mlp_xavier_forward.1} parent=0 // pred_fallthru
    _
  // Predicated region
  $region6: #{mlp_xavier_forward.1} parent=0 // pred_check
    _
  $region7: #{mlp_xavier_forward.1} parent=0 // pred_check_branch
    %13 = sbr.rel (0) target = $region9
  $region8: #{mlp_xavier_forward.1} parent=0 // pred_region
    _
  $region9: #{mlp_xavier_forward.1} parent=0 // pred_fallthru
    _
  // Predicated region
  $region10: #{mlp_xavier_forward.1} parent=0 // pred_check
    _
  $region11: #{mlp_xavier_forward.1} parent=0 // pred_check_branch
    %15 = sbr.rel (0) target = $region13
  $region12: #{mlp_xavier_forward.1} parent=0 // pred_region
    _
  $region13: #{mlp_xavier_forward.1} parent=0 // pred_fallthru
    _
  // Predicated region
  $region14: #{mlp_xavier_forward.1} parent=0 // pred_check
    _
  $region15: #{mlp_xavier_forward.1} parent=0 // pred_check_branch
    %17 = sbr.rel (0) target = $region17
  $region16: #{mlp_xavier_forward.1} parent=0 // pred_region
    _
  $region17: #{mlp_xavier_forward.1} parent=0 // pred_fallthru
    _
  // Predicated region
  $region18: #{mlp_xavier_forward.1} parent=0 // pred_check
    _
  $region19: #{mlp_xavier_forward.1} parent=0 // pred_check_branch
    %19 = sbr.rel (0) target = $region21
  $region20: #{mlp_xavier_forward.1} parent=0 // pred_region
    _
  $region21: #{mlp_xavier_forward.1} parent=0 // pred_fallthru
    _
  %v21 = vld [vmem:[%s0] sm:$0xf]
  %v22 = vld [vmem:[%s0 + $0x4] sm:$0xf]
  %v23 = vld [vmem:[%s1] sm:$0xff]
  %v24 = vld [vmem:[%s1 + $0x8] sm:$0xff]
  %v25 = vld [vmem:[%s1 + $0x10] sm:$0xff]
  %v26 = vld [vmem:[%s1 + $0x18] sm:$0xff]
  %v27 = vld [vmem:[%s1 + $0x20] sm:$0xff]
  %v28 = vld [vmem:[%s1 + $0x28] sm:$0xff]
  %v29 = vld [vmem:[%s1 + $0x30] sm:$0xff]
  %v30 = vld [vmem:[%s1 + $0x38] sm:$0xff]
  %v31 = vld [vmem:[%s1 + $0x40] sm:$0xff]
  %v32 = vld [vmem:[%s1 + $0x48] sm:$0xff]
  %v33 = vld [vmem:[%s1 + $0x50] sm:$0xff]
  %v34 = vld [vmem:[%s1 + $0x58] sm:$0xff]
  %v35 = vld [vmem:[%s1 + $0x60] sm:$0xff]
  %v36 = vld [vmem:[%s1 + $0x68] sm:$0xff]
  %v37 = vld [vmem:[%s1 + $0x70] sm:$0xff]
  %v38 = vld [vmem:[%s1 + $0x78] sm:$0xff]
  %v39 = vld [vmem:[%s2] sm:$0x3]
  %v41 = vlaneseq
  %v42 = vshrl.u32 %v41, 7
  %v43 = vsub.s32 0, %v42
  %v44 = vrot.slane %v39, %v43
  %v45 = vlaneseq
  %v46 = vshrl.u32 %v45, 7
  %v47 = vsub.s32 1, %v46
  %v48 = vrot.slane %v39, %v47
  %v53 = vunpack.c.l.b16 %v21
  %v54 = vunpack.c.l.b16 %v22
  %v55 = vpack.c.b16 %v54, %v53
  %v73 = vunpack.c.l.b16 %v23
  %v74 = vunpack.c.h.b16 %v23
  %v75 = vunpack.c.l.b16 %v24
  %v76 = vunpack.c.h.b16 %v24
  %v77 = vunpack.c.l.b16 %v25
  %v78 = vunpack.c.h.b16 %v25
  %v79 = vunpack.c.l.b16 %v26
  %v80 = vunpack.c.h.b16 %v26
  %v81 = vunpack.c.l.b16 %v27
  %v82 = vunpack.c.h.b16 %v27
  %v83 = vunpack.c.l.b16 %v28
  %v84 = vunpack.c.h.b16 %v28
  %v85 = vunpack.c.l.b16 %v29
  %v86 = vunpack.c.h.b16 %v29
  %v87 = vunpack.c.l.b16 %v30
  %v88 = vunpack.c.h.b16 %v30
  %v89 = vunpack.c.l.b16 %v31
  %v90 = vunpack.c.h.b16 %v31
  %v91 = vunpack.c.l.b16 %v32
  %v92 = vunpack.c.h.b16 %v32
  %v93 = vunpack.c.l.b16 %v33
  %v94 = vunpack.c.h.b16 %v33
  %v95 = vunpack.c.l.b16 %v34
  %v96 = vunpack.c.h.b16 %v34
  %v97 = vunpack.c.l.b16 %v35
  %v98 = vunpack.c.h.b16 %v35
  %v99 = vunpack.c.l.b16 %v36
  %v100 = vunpack.c.h.b16 %v36
  %v101 = vunpack.c.l.b16 %v37
  %v102 = vunpack.c.h.b16 %v37
  %v103 = vunpack.c.l.b16 %v38
  %v104 = vunpack.c.h.b16 %v38
  %v105 = vpack.c.b16 %v75, %v73
  %v106 = vpack.c.b16 %v76, %v74
  %v107 = vpack.c.b16 %v79, %v77
  %v108 = vpack.c.b16 %v80, %v78
  %v109 = vpack.c.b16 %v83, %v81
  %v110 = vpack.c.b16 %v84, %v82
  %v111 = vpack.c.b16 %v87, %v85
  %v112 = vpack.c.b16 %v88, %v86
  %v113 = vpack.c.b16 %v91, %v89
  %v114 = vpack.c.b16 %v92, %v90
  %v115 = vpack.c.b16 %v95, %v93
  %v116 = vpack.c.b16 %v96, %v94
  %v117 = vpack.c.b16 %v99, %v97
  %v118 = vpack.c.b16 %v100, %v98
  %v119 = vpack.c.b16 %v103, %v101
  %v120 = vpack.c.b16 %v104, %v102
  %137 = vmatprep.subr.bf16.mxu0 %v106
  %138 = vmatpush1.bf16.msra.mxu0 %v105
  %139 = vmatprep.subr.bf16.mxu0 %v108
  %140 = vmatpush1.bf16.msra.mxu0 %v107
  %141 = vmatprep.subr.bf16.mxu0 %v110
  %142 = vmatpush1.bf16.msra.mxu0 %v109
  %143 = vmatprep.subr.bf16.mxu0 %v112
  %144 = vmatpush1.bf16.msra.mxu0 %v111
  %145 = vmatprep.subr.bf16.mxu0 %v114
  %146 = vmatpush1.bf16.msra.mxu0 %v113
  %147 = vmatprep.subr.bf16.mxu0 %v116
  %148 = vmatpush1.bf16.msra.mxu0 %v115
  %149 = vmatprep.subr.bf16.mxu0 %v118
  %150 = vmatpush1.bf16.msra.mxu0 %v117
  %151 = vmatprep.subr.bf16.mxu0 %v120
  %152 = vmatpush1.bf16.msra.mxu0 %v119
  %153 = vmatprep.subr.bf16.mxu0 0
  %154 = vmatpush1.bf16.msra.mxu0 0
  %155 = vmatprep.subr.bf16.mxu0 0
  %156 = vmatpush1.bf16.msra.mxu0 0
  %157 = vmatprep.subr.bf16.mxu0 0
  %158 = vmatpush1.bf16.msra.mxu0 0
  %159 = vmatprep.subr.bf16.mxu0 0
  %160 = vmatpush1.bf16.msra.mxu0 0
  %161 = vmatprep.subr.bf16.mxu0 0
  %162 = vmatpush1.bf16.msra.mxu0 0
  %163 = vmatprep.subr.bf16.mxu0 0
  %164 = vmatpush1.bf16.msra.mxu0 0
  %165 = vmatprep.subr.bf16.mxu0 0
  %166 = vmatpush1.bf16.msra.mxu0 0
  %167 = vmatprep.subr.bf16.mxu0 0
  %168 = vmatpush1.bf16.msra.mxu0 0
  %169 = vmatprep.mubr.bf16.mxu0 0
  %170 = vmatmul.mubr.bf16.gmra.mrb[0].mxu0 %v55
  %v171 = vpop.f32.mrb[0].mxu0
  %v172 = vadd.f32 %v44, %v171
  %v173 = vpop.f32.mrb[0].mxu0
  %v174 = vadd.f32 %v48, %v173
  %v175 = vpop.f32.mrb[0].mxu0
  %v176 = vadd.f32 %v44, %v175
  %v177 = vpop.f32.mrb[0].mxu0
  %v178 = vadd.f32 %v48, %v177
  %179 = vdwg.mxu0
  %v180 = vmax.f32 %v172, 0.0
  %v181 = vmax.f32 %v174, 0.0
  %v182 = vmax.f32 %v176, 0.0
  %v183 = vmax.f32 %v178, 0.0
  %v184 = vpack.c.bf16 %v182, %v180
  %v185 = vpack.c.bf16 %v183, %v181
  %v186 = vld [vmem:[%s3] sm:$0xf]
  %v187 = vld [vmem:[%s3 + $0x4] sm:$0xf]
  %v188 = vld [vmem:[%s3 + $0x8] sm:$0xf]
  %v189 = vld [vmem:[%s3 + $0xc] sm:$0xf]
  %v190 = vld [vmem:[%s3 + $0x10] sm:$0xf]
  %v191 = vld [vmem:[%s3 + $0x14] sm:$0xf]
  %v192 = vld [vmem:[%s3 + $0x18] sm:$0xf]
  %v193 = vld [vmem:[%s3 + $0x1c] sm:$0xf]
  %v194 = vld [vmem:[%s3 + $0x20] sm:$0xf]
  %v195 = vld [vmem:[%s3 + $0x24] sm:$0xf]
  %v196 = vld [vmem:[%s3 + $0x28] sm:$0xf]
  %v197 = vld [vmem:[%s3 + $0x2c] sm:$0xf]
  %v198 = vld [vmem:[%s3 + $0x30] sm:$0xf]
  %v199 = vld [vmem:[%s3 + $0x34] sm:$0xf]
  %v200 = vld [vmem:[%s3 + $0x38] sm:$0xf]
  %v201 = vld [vmem:[%s3 + $0x3c] sm:$0xf]
  %v202 = vld [vmem:[%s3 + $0x40] sm:$0xf]
  %v203 = vld [vmem:[%s3 + $0x44] sm:$0xf]
  %v204 = vld [vmem:[%s3 + $0x48] sm:$0xf]
  %v205 = vld [vmem:[%s3 + $0x4c] sm:$0xf]
  %v206 = vld [vmem:[%s3 + $0x50] sm:$0xf]
  %v207 = vld [vmem:[%s3 + $0x54] sm:$0xf]
  %v208 = vld [vmem:[%s3 + $0x58] sm:$0xf]
  %v209 = vld [vmem:[%s3 + $0x5c] sm:$0xf]
  %v210 = vld [vmem:[%s3 + $0x60] sm:$0xf]
  %v211 = vld [vmem:[%s3 + $0x64] sm:$0xf]
  %v212 = vld [vmem:[%s3 + $0x68] sm:$0xf]
  %v213 = vld [vmem:[%s3 + $0x6c] sm:$0xf]
  %v214 = vld [vmem:[%s3 + $0x70] sm:$0xf]
  %v215 = vld [vmem:[%s3 + $0x74] sm:$0xf]
  %v216 = vld [vmem:[%s3 + $0x78] sm:$0xf]
  %v217 = vld [vmem:[%s3 + $0x7c] sm:$0xf]
  %v218 = vld [vmem:[%s4] sm:$0x1]
  %v220 = vlaneseq
  %v221 = vshrl.u32 %v220, 7
  %v222 = vsub.s32 0, %v221
  %v223 = vrot.slane %v218, %v222
  %v257 = vunpack.c.l.b16 %v186
  %v258 = vunpack.c.l.b16 %v187
  %v259 = vunpack.c.l.b16 %v188
  %v260 = vunpack.c.l.b16 %v189
  %v261 = vunpack.c.l.b16 %v190
  %v262 = vunpack.c.l.b16 %v191
  %v263 = vunpack.c.l.b16 %v192
  %v264 = vunpack.c.l.b16 %v193
  %v265 = vunpack.c.l.b16 %v194
  %v266 = vunpack.c.l.b16 %v195
  %v267 = vunpack.c.l.b16 %v196
  %v268 = vunpack.c.l.b16 %v197
  %v269 = vunpack.c.l.b16 %v198
  %v270 = vunpack.c.l.b16 %v199
  %v271 = vunpack.c.l.b16 %v200
  %v272 = vunpack.c.l.b16 %v201
  %v273 = vunpack.c.l.b16 %v202
  %v274 = vunpack.c.l.b16 %v203
  %v275 = vunpack.c.l.b16 %v204
  %v276 = vunpack.c.l.b16 %v205
  %v277 = vunpack.c.l.b16 %v206
  %v278 = vunpack.c.l.b16 %v207
  %v279 = vunpack.c.l.b16 %v208
  %v280 = vunpack.c.l.b16 %v209
  %v281 = vunpack.c.l.b16 %v210
  %v282 = vunpack.c.l.b16 %v211
  %v283 = vunpack.c.l.b16 %v212
  %v284 = vunpack.c.l.b16 %v213
  %v285 = vunpack.c.l.b16 %v214
  %v286 = vunpack.c.l.b16 %v215
  %v287 = vunpack.c.l.b16 %v216
  %v288 = vunpack.c.l.b16 %v217
  %v289 = vpack.c.b16 %v258, %v257
  %v290 = vpack.c.b16 %v260, %v259
  %v291 = vpack.c.b16 %v262, %v261
  %v292 = vpack.c.b16 %v264, %v263
  %v293 = vpack.c.b16 %v266, %v265
  %v294 = vpack.c.b16 %v268, %v267
  %v295 = vpack.c.b16 %v270, %v269
  %v296 = vpack.c.b16 %v272, %v271
  %v297 = vpack.c.b16 %v274, %v273
  %v298 = vpack.c.b16 %v276, %v275
  %v299 = vpack.c.b16 %v278, %v277
  %v300 = vpack.c.b16 %v280, %v279
  %v301 = vpack.c.b16 %v282, %v281
  %v302 = vpack.c.b16 %v284, %v283
  %v303 = vpack.c.b16 %v286, %v285
  %v304 = vpack.c.b16 %v288, %v287
  %321 = vmatprep.subr.bf16.mxu0 0
  %322 = vmatpush1.bf16.msra.mxu0 %v289
  %323 = vmatprep.subr.bf16.mxu0 0
  %324 = vmatpush1.bf16.msra.mxu0 %v290
  %325 = vmatprep.subr.bf16.mxu0 0
  %326 = vmatpush1.bf16.msra.mxu0 %v291
  %327 = vmatprep.subr.bf16.mxu0 0
  %328 = vmatpush1.bf16.msra.mxu0 %v292
  %329 = vmatprep.subr.bf16.mxu0 0
  %330 = vmatpush1.bf16.msra.mxu0 %v293
  %331 = vmatprep.subr.bf16.mxu0 0
  %332 = vmatpush1.bf16.msra.mxu0 %v294
  %333 = vmatprep.subr.bf16.mxu0 0
  %334 = vmatpush1.bf16.msra.mxu0 %v295
  %335 = vmatprep.subr.bf16.mxu0 0
  %336 = vmatpush1.bf16.msra.mxu0 %v296
  %337 = vmatprep.subr.bf16.mxu0 0
  %338 = vmatpush1.bf16.msra.mxu0 %v297
  %339 = vmatprep.subr.bf16.mxu0 0
  %340 = vmatpush1.bf16.msra.mxu0 %v298
  %341 = vmatprep.subr.bf16.mxu0 0
  %342 = vmatpush1.bf16.msra.mxu0 %v299
  %343 = vmatprep.subr.bf16.mxu0 0
  %344 = vmatpush1.bf16.msra.mxu0 %v300
  %345 = vmatprep.subr.bf16.mxu0 0
  %346 = vmatpush1.bf16.msra.mxu0 %v301
  %347 = vmatprep.subr.bf16.mxu0 0
  %348 = vmatpush1.bf16.msra.mxu0 %v302
  %349 = vmatprep.subr.bf16.mxu0 0
  %350 = vmatpush1.bf16.msra.mxu0 %v303
  %351 = vmatprep.subr.bf16.mxu0 0
  %352 = vmatpush1.bf16.msra.mxu0 %v304
  %353 = vmatprep.mubr.bf16.mxu0 %v185
  %354 = vmatmul.mubr.bf16.gmra.mrb[0].mxu0 %v184
  %v355 = vpop.f32.mrb[0].mxu0
  %v356 = vadd.f32 %v223, %v355
  %v357 = vpop.f32.mrb[0].mxu0
  %v358 = vpop.f32.mrb[0].mxu0
  %v359 = vadd.f32 %v223, %v358
  %v360 = vpop.f32.mrb[0].mxu0
  %361 = vdwg.mxu0
  %362 = vst [vmem:[%s5] sm:$0xff] %v356
  %363 = vst [vmem:[%s5 + $0x8] sm:$0xff] %v359
  // Predicated region
  $region22: #{mlp_xavier_forward.1} parent=0 // pred_check
    _
  $region23: #{mlp_xavier_forward.1} parent=0 // pred_check_branch
    %365 = sbr.rel (0) target = $region25
  $region24: #{mlp_xavier_forward.1} parent=0 // pred_region
    _
  $region25: #{mlp_xavier_forward.1} parent=0 // pred_fallthru
    _
  // Predicated region
  $region26: #{mlp_xavier_forward.1} parent=0 // pred_check
    _
  $region27: #{mlp_xavier_forward.1} parent=0 // pred_check_branch
    %367 = sbr.rel (0) target = $region29
  $region28: #{mlp_xavier_forward.1} parent=0 // pred_region
    _
  $region29: #{mlp_xavier_forward.1} parent=0 // pred_fallthru
    _

</llo_original>
